<compile_context>
chip_gen: v5e
topology: v5e:2x2
jax: 0.10.0
libtpu: 0.0.40
codegen_flags: <defaults>
</compile_context>

<pallas_src>
import jax
import jax.numpy as jnp
from jax.experimental import pallas as pl
from jax.experimental.pallas import tpu as pltpu


def _gelu_tanh(x):
    # tanh-approximated GELU (== torch F.gelu(approximate='tanh')).
    # TODO(synk): torch default is the exact erf GELU; the tanh approximation
    # deviates by <~1e-3 but lowers robustly to the TPU EUP.
    c = jnp.float32(0.7978845608028654)  # sqrt(2/pi)
    return 0.5 * x * (1.0 + jnp.tanh(c * (x + 0.044715 * x * x * x)))


def _ffn_kernel(x_ref, w1_ref, w2_ref, o_ref, acc_ref):
    # One (row-tile i, inner-chunk c) grid step.
    #   x_ref : (tm, dim_p)       input rows (same block across the c axis)
    #   w1_ref: (dim_p, 2*tk)     chunk c of W1: [:, :tk]=value half, [:, tk:]=gate half
    #   w2_ref: (tk, dim_p)       chunk c of W2
    #   o_ref : (tm, dim_p)       output rows (written on the last inner chunk)
    #   acc_ref: (tm, dim_p) f32  VMEM accumulator
    c = pl.program_id(1)

    @pl.when(c == 0)
    def _init():
        acc_ref[...] = jnp.zeros_like(acc_ref)

    tk = w2_ref.shape[0]
    # bf16 MXU operands, f32 accumulation.
    x = x_ref[...].astype(jnp.bfloat16)
    y = jnp.dot(x, w1_ref[...], preferred_element_type=jnp.float32)  # (tm, 2*tk)
    a = y[:, :tk]                 # value half (128-aligned lane slice)
    g = y[:, tk:]                 # gate half
    h = a * _gelu_tanh(g)         # GEGLU, f32 VPU/EUP math
    # Dropout(p=0.0) -> identity.
    # TODO(synk): training-mode dropout would need pltpu.prng_seed /
    # pltpu.prng_random_bits masking here.
    # h deliberately downcast to bf16 for the second MXU matmul (f32 acc).
    acc_ref[...] += jnp.dot(h.astype(jnp.bfloat16), w2_ref[...],
                            preferred_element_type=jnp.float32)

    @pl.when(c == pl.num_programs(1) - 1)
    def _finalize():
        o_ref[...] = acc_ref[...].astype(o_ref.dtype)


def _round_up(x, m):
    return (x + m - 1) // m * m


def feed_forward_pallas(x, w1, w2, *, tile_m=512, block_inner=512):
    """FeedForward forward pass (Linear -> GEGLU -> Dropout(0) -> Linear).

    x : (..., dim)
    w1: (dim, 2*inner)  fused GEGLU projection, no bias (value half, then gate half)
    w2: (inner, dim)    output projection, no bias
    """
    *lead, dim = x.shape
    inner = w2.shape[0]
    assert w1.shape == (dim, 2 * inner) and w2.shape == (inner, dim)

    x2 = x.reshape(-1, dim)
    m = x2.shape[0]

    # Row (token) tiling: multiple of 8 sublanes; keep >=2 row steps for long
    # sequences so megacore (v7x) can balance the "parallel" axis.
    tm = min(tile_m, _round_up(m, 8))
    tm = max(8, (tm // 8) * 8)
    m_pad = _round_up(m, tm)

    # Lane-dense feature dim: pad to a multiple of 128 (unmasked vst, full MXU K).
    dim_p = _round_up(dim, 128)

    # Inner (hidden) dim chunking: multiples of 128 lanes, default 512.
    tk = _round_up(min(block_inner, _round_up(inner, 128)), 128)
    inner_p = _round_up(inner, tk)
    n_k = inner_p // tk

    # Zero padding is exact: padded weight rows/cols contribute nothing.
    x2 = jnp.pad(x2, ((0, m_pad - m), (0, dim_p - dim)))

    w1v = jnp.pad(w1[:, :inner], ((0, dim_p - dim), (0, inner_p - inner)))
    w1g = jnp.pad(w1[:, inner:], ((0, dim_p - dim), (0, inner_p - inner)))
    # Interleave value/gate chunks so one (dim_p, 2*tk) block per grid step feeds
    # a single fused first-layer matmul (x streamed through the MXU once).
    w1_il = jnp.stack(
        [w1v.reshape(dim_p, n_k, tk), w1g.reshape(dim_p, n_k, tk)], axis=2
    ).reshape(dim_p, n_k * 2 * tk).astype(jnp.bfloat16)

    w2_p = jnp.pad(w2, ((0, inner_p - inner), (0, dim_p - dim))).astype(jnp.bfloat16)

    out = pl.pallas_call(
        _ffn_kernel,
        out_shape=jax.ShapeDtypeStruct((m_pad, dim_p), x.dtype),
        grid_spec=pltpu.PrefetchScalarGridSpec(
            num_scalar_prefetch=0,
            grid=(m_pad // tm, n_k),                 # rows parallel, reduction last
            in_specs=[
                pl.BlockSpec((tm, dim_p), lambda i, c: (i, 0)),       # x rows
                pl.BlockSpec((dim_p, 2 * tk), lambda i, c: (0, c)),   # W1 chunk
                pl.BlockSpec((tk, dim_p), lambda i, c: (c, 0)),       # W2 chunk
            ],
            out_specs=pl.BlockSpec((tm, dim_p), lambda i, c: (i, 0)),
            scratch_shapes=[pltpu.VMEM((tm, dim_p), jnp.float32)],
        ),
        compiler_params=pltpu.CompilerParams(
            dimension_semantics=("parallel", "arbitrary"),
            # Explicit scoped-VMEM budget: fits all of v5e/v6e (128 MiB) and
            # v7x (64 MiB per TC) with headroom.
            vmem_limit_bytes=48 * 1024 * 1024,
        ),
    )(x2, w1_il, w2_p)

    out = out[:m, :dim]
    return out.reshape(*lead, dim)


if __name__ == "__main__":
    key = jax.random.PRNGKey(0)

    # Small shapes consistent with the module: dim=96, mult=4 -> inner_dim=256.
    batch, seq, dim, mult = 2, 64, 96, 4
    inner = dim * mult * 2 // 3  # 256

    kx, k1, k2 = jax.random.split(key, 3)
    x = jax.random.normal(kx, (batch, seq, dim), dtype=jnp.float32)
    w1 = jax.random.normal(k1, (dim, 2 * inner), dtype=jnp.float32) / jnp.sqrt(dim)
    w2 = jax.random.normal(k2, (inner, dim), dtype=jnp.float32) / jnp.sqrt(inner)

    # tile_m=64, block_inner=128 -> 2 row tiles x 2 inner chunks: exercises the
    # pipelined row axis, the inner-reduction accumulator and the dim padding
    # (dim=96 -> 128 lanes).
    out = feed_forward_pallas(x, w1, w2, tile_m=64, block_inner=128)
    out = jax.block_until_ready(out)

    # Pure-JAX reference with the same numerics the kernel uses
    # (bf16 matmul operands, f32 accumulation, tanh GELU).
    xb = x.reshape(-1, dim).astype(jnp.bfloat16)
    y = jnp.einsum("md,de->me", xb, w1.astype(jnp.bfloat16),
                   preferred_element_type=jnp.float32)
    a, g = y[:, :inner], y[:, inner:]
    h = (a * _gelu_tanh(g)).astype(jnp.bfloat16)
    ref = jnp.einsum("me,ed->md", h, w2.astype(jnp.bfloat16),
                     preferred_element_type=jnp.float32).reshape(batch, seq, dim)

    assert out.shape == ref.shape, (out.shape, ref.shape)
    max_err = float(jnp.max(jnp.abs(out - ref.astype(out.dtype))))
    assert max_err < 2e-2, f"max_err={max_err}"
    print("KERNEL_OK")
</pallas_src>

<mosaic_0001>
module attributes {stable_mosaic.version = 11 : i64} {
  func.func @_ffn_kernel(%arg0: i32, %arg1: i32, %arg2: memref<64x128xf32, #tpu.memory_space<vmem>>, %arg3: memref<128x256xbf16, #tpu.memory_space<vmem>>, %arg4: memref<128x128xbf16, #tpu.memory_space<vmem>>, %arg5: memref<64x128xf32, #tpu.memory_space<vmem>>, %arg6: memref<64x128xf32, #tpu.memory_space<vmem>>) attributes {dimension_semantics = [#tpu.dimension_semantics<parallel>, #tpu.dimension_semantics<arbitrary>], iteration_bounds = array<i64: 2, 2>, scalar_prefetch = 0 : i64, scratch_operands = 1 : i64, tpu.core_type = #tpu.core_type<tc>, window_params = [{transform_indices = @transform_0, window_bounds = array<i64: 64, 128>}, {transform_indices = @transform_1, window_bounds = array<i64: 128, 256>}, {transform_indices = @transform_2, window_bounds = array<i64: 128, 128>}, {transform_indices = @transform_3, window_bounds = array<i64: 64, 128>}]} {
    %c0_i32 = arith.constant 0 : i32
    %0 = arith.cmpi eq, %arg1, %c0_i32 : i32
    %1 = arith.extui %0 : i1 to i32
    %c0_i32_0 = arith.constant 0 : i32
    %2 = arith.cmpi ne, %1, %c0_i32_0 : i32
    scf.if %2 {
      %cst_16 = arith.constant 0.000000e+00 : f32
      %32 = vector.broadcast %cst_16 : f32 to vector<64x128xf32>
      %c0_17 = arith.constant 0 : index
      %c0_18 = arith.constant 0 : index
      %33 = vector.load %arg6[%c0_17, %c0_18] : memref<64x128xf32, #tpu.memory_space<vmem>>, vector<64x128xf32>
      tpu.vector_store %arg6[%c0_17, %c0_18], %32 {strides = array<i32>} : memref<64x128xf32, #tpu.memory_space<vmem>>, vector<64x128xf32>,
    } else {
    }
    %c0 = arith.constant 0 : index
    %c0_1 = arith.constant 0 : index
    %3 = vector.load %arg2[%c0, %c0_1] : memref<64x128xf32, #tpu.memory_space<vmem>>, vector<64x128xf32>
    %4 = arith.truncf %3 : vector<64x128xf32> to vector<64x128xbf16>
    %c0_2 = arith.constant 0 : index
    %c0_3 = arith.constant 0 : index
    %5 = vector.load %arg3[%c0_2, %c0_3] : memref<128x256xbf16, #tpu.memory_space<vmem>>, vector<128x256xbf16>
    %cst = arith.constant dense<0.000000e+00> : vector<64x256xf32>
    %6 = tpu.matmul %4, %5, %cst {dimension_numbers = #tpu.dot_dimension_numbers<[1], [0], [0], [1], [0, 0, 1, 1], [], []>} : vector<64x128xbf16>, vector<128x256xbf16>, vector<64x256xf32> -> vector<64x256xf32>
    %7 = vector.extract_strided_slice %6 {offsets = [0, 0], sizes = [64, 128], strides = [1, 1]} : vector<64x256xf32> to vector<64x128xf32>
    %8 = vector.extract_strided_slice %6 {offsets = [0, 128], sizes = [64, 128], strides = [1, 1]} : vector<64x256xf32> to vector<64x128xf32>
    %cst_4 = arith.constant 5.000000e-01 : f32
    %9 = vector.broadcast %cst_4 : f32 to vector<64x128xf32>
    %10 = arith.mulf %9, %8 : vector<64x128xf32>
    %cst_5 = arith.constant 4.471500e-02 : f32
    %11 = vector.broadcast %cst_5 : f32 to vector<64x128xf32>
    %12 = arith.mulf %11, %8 : vector<64x128xf32>
    %13 = arith.mulf %12, %8 : vector<64x128xf32>
    %14 = arith.mulf %13, %8 : vector<64x128xf32>
    %15 = arith.addf %8, %14 : vector<64x128xf32>
    %cst_6 = arith.constant 0.797884583 : f32
    %16 = vector.broadcast %cst_6 : f32 to vector<64x128xf32>
    %17 = arith.mulf %16, %15 : vector<64x128xf32>
    %18 = math.tanh %17 : vector<64x128xf32>
    %cst_7 = arith.constant 1.000000e+00 : f32
    %19 = vector.broadcast %cst_7 : f32 to vector<64x128xf32>
    %20 = arith.addf %19, %18 : vector<64x128xf32>
    %21 = arith.mulf %10, %20 : vector<64x128xf32>
    %22 = arith.mulf %7, %21 : vector<64x128xf32>
    %c0_8 = arith.constant 0 : index
    %c0_9 = arith.constant 0 : index
    %23 = vector.load %arg6[%c0_8, %c0_9] : memref<64x128xf32, #tpu.memory_space<vmem>>, vector<64x128xf32>
    %24 = arith.truncf %22 : vector<64x128xf32> to vector<64x128xbf16>
    %c0_10 = arith.constant 0 : index
    %c0_11 = arith.constant 0 : index
    %25 = vector.load %arg4[%c0_10, %c0_11] : memref<128x128xbf16, #tpu.memory_space<vmem>>, vector<128x128xbf16>
    %cst_12 = arith.constant dense<0.000000e+00> : vector<64x128xf32>
    %26 = tpu.matmul %24, %25, %cst_12 {dimension_numbers = #tpu.dot_dimension_numbers<[1], [0], [0], [1], [0, 0, 1, 1], [], []>} : vector<64x128xbf16>, vector<128x128xbf16>, vector<64x128xf32> -> vector<64x128xf32>
    %27 = arith.addf %23, %26 : vector<64x128xf32>
    %c0_13 = arith.constant 0 : index
    %c0_14 = arith.constant 0 : index
    %28 = vector.load %arg6[%c0_13, %c0_14] : memref<64x128xf32, #tpu.memory_space<vmem>>, vector<64x128xf32>
    tpu.vector_store %arg6[%c0_13, %c0_14], %27 {strides = array<i32>} : memref<64x128xf32, #tpu.memory_space<vmem>>, vector<64x128xf32>,
    %c1_i32 = arith.constant 1 : i32
    %29 = arith.cmpi eq, %arg1, %c1_i32 : i32
    %30 = arith.extui %29 : i1 to i32
    %c0_i32_15 = arith.constant 0 : i32
    %31 = arith.cmpi ne, %30, %c0_i32_15 : i32
    scf.if %31 {
      %c0_16 = arith.constant 0 : index
      %c0_17 = arith.constant 0 : index
      %32 = vector.load %arg6[%c0_16, %c0_17] : memref<64x128xf32, #tpu.memory_space<vmem>>, vector<64x128xf32>
      %c0_18 = arith.constant 0 : index
      %c0_19 = arith.constant 0 : index
      %33 = vector.load %arg5[%c0_18, %c0_19] : memref<64x128xf32, #tpu.memory_space<vmem>>, vector<64x128xf32>
      tpu.vector_store %arg5[%c0_18, %c0_19], %32 {strides = array<i32>} : memref<64x128xf32, #tpu.memory_space<vmem>>, vector<64x128xf32>,
    } else {
    }
    return
  }
  func.func @transform_0(%arg0: i32, %arg1: i32) -> (i32, i32) {
    %c0_i32 = arith.constant 0 : i32
    %c0_i32_0 = arith.constant 0 : i32
    return %arg0, %c0_i32 : i32, i32
  }
  func.func @transform_1(%arg0: i32, %arg1: i32) -> (i32, i32) {
    %c0_i32 = arith.constant 0 : i32
    %c0_i32_0 = arith.constant 0 : i32
    return %c0_i32, %arg1 : i32, i32
  }
  func.func @transform_2(%arg0: i32, %arg1: i32) -> (i32, i32) {
    %c0_i32 = arith.constant 0 : i32
    %c0_i32_0 = arith.constant 0 : i32
    return %arg1, %c0_i32 : i32, i32
  }
  func.func @transform_3(%arg0: i32, %arg1: i32) -> (i32, i32) {
    %c0_i32 = arith.constant 0 : i32
    %c0_i32_0 = arith.constant 0 : i32
    return %arg0, %c0_i32 : i32, i32
  }
}

</mosaic_0001>

<llo_original>
// kernel: tpu_custom_call.1
$region0: #{tpu_custom_call.1}
  #allocation0 [shape = 'u32[]', space=smem, size = 0x4, offset = 0x4, fixed_abs, tag = 'smem constant byte address 0x4 - core index']
  #allocation1 [shape = 'u32[72,128]{1,0:T(1,128)}', space=vmem, size = 0x9000, scoped, tag = 'internal scratch']
  #allocation2 [shape = 'f32[64,128]{1,0:T(8,128)}', space=vmem, size = 0x8000, scoped, tag = 'scratch operand']
  %s0 = inlined_call_operand.hbm [shape: f32[128,128], index: 0, kind: input, shape index: {}]
  %s1 = inlined_call_operand.hbm [shape: bf16[128,512], index: 1, kind: input, shape index: {}]
  %s2 = inlined_call_operand.hbm [shape: bf16[256,128], index: 2, kind: input, shape index: {}]
  %s3 = inlined_call_operand.hbm [shape: f32[128,128], index: 3, kind: output, shape index: {}]
  %s4 = sld [smem:[#allocation0]]
  $region65: #{tpu_custom_call.1} parent=0
    _
  %s6 = ssub.s32 1, %s4
  %s7 = scalar_select 0, %s6, %s4
  $region1: #{tpu_custom_call.1} parent=0
    #allocation3 [shape = 'u8[65536]{0}', space=vmem, size = 0x10000, scoped, tag = 'input window, operand 0']
    #allocation4 [shape = 's32[2]{0}', space=sflag, size = 0x8, scoped, tag = 'scoped memory for tpu_custom_call.1']
    #allocation5 [shape = 's32[2]{0}', space=sflag, size = 0x8, scoped, tag = 'scoped memory for tpu_custom_call.1']
    #allocation6 [shape = 'u8[131072]{0}', space=vmem, size = 0x20000, scoped, tag = 'input window, operand 1']
    #allocation7 [shape = 's32[2]{0}', space=sflag, size = 0x8, scoped, tag = 'scoped memory for tpu_custom_call.1']
    #allocation8 [shape = 'u8[65536]{0}', space=vmem, size = 0x10000, scoped, tag = 'input window, operand 2']
    #allocation9 [shape = 'u8[65536]{0}', space=vmem, size = 0x10000, scoped, tag = 'output window, operand 0']
    %8 = vsyncpa [#allocation4], 0
    %s9 = scalar_lea.sflag [#allocation4], 1
    %10 = vsyncpa %s9, 0
    %11 = vsyncpa [#allocation7], 0
    %s12 = scalar_lea.sflag [#allocation7], 1
    %13 = vsyncpa %s12, 0
    %14 = vsyncpa [#allocation5], 0
    %s15 = scalar_lea.sflag [#allocation5], 1
    %16 = vsyncpa %s15, 0
    loop: start=0, step=1, limit=6
    $region2: #{tpu_custom_call.1} parent=1 // loop_pre_header
      _
    $region3: #{tpu_custom_call.1} parent=1 // loop_header
      %s18 = sphi 0, %s22
      %p19 = scmp.ge.s32.totalorder %s18, 6
      %s25 = sphi 0, %s37
      %s26 = sphi 0, %s33
      %s27 = sphi 0, %s25
      %s28 = sphi 0, %s26
      %s29 = sphi 0, %s27
      %s30 = sphi 0, %s28
      %s40 = sphi 0, %s42
      %s43 = sphi 0, %s40
      %s44 = sphi 0, %s43
      %s60 = sphi 0, %s44
      %s66 = sphi 0, %s68
      %s69 = sphi 0, %s66
      %s70 = sphi 0, %s69
      %s86 = sphi 0, %s70
      %s92 = sphi 0, %s94
      %s95 = sphi 0, %s92
      %s96 = sphi 0, %s95
      %s112 = sphi 0, %s96
      %s118 = sphi 0, %s120
      %s121 = sphi 0, %s118
      %s122 = sphi 0, %s121
      %s138 = sphi 0, %s122
    $region4: #{tpu_custom_call.1} parent=1 // loop_header_branch
      %21 = sbr.rel (%p19) target = $region8
    $region5: #{tpu_custom_call.1} parent=1 // loop_body
      %s23 = ssub.s32 %s18, 1
      %s24 = ssub.s32 %s18, 2
      %s31 = sadd.s32 1, %s26
      %p32 = scmp.ge.s32.totalorder %s31, 2
      %s33 = scalar_select %p32, 0, %s31
      %s34 = sadd.s32 1, %s25
      %s35 = scalar_select %p32, %s34, %s25
      %p36 = scmp.ge.s32.totalorder %s35, 2
      %s37 = scalar_select %p36, 0, %s35
      %s38 = ssub.s32 %s25, %s37
      %p39 = scmp.eq.s32.totalorder %s38, 0
      %s41 = sadd.s32 %s40, 1
      %s42 = scalar_select %p39, %s40, %s41
      %p45 = pneg %p39
      %p46 = scmp.eq.s32.totalorder %s18, 3
      %p47 = por %p45, %p46
      %p48 = scmp.ne.s32.totalorder %s40, %s43
      %p49 = scmp.eq.s32.totalorder %s18, 0
      %p50 = por %p48, %p49
      %p51 = scmp.ne.s32.totalorder %s40, %s43
      %p52 = scmp.eq.s32.totalorder %s23, 3
      %p53 = por %p51, %p52
      %p54 = scmp.ne.s32.totalorder %s43, %s44
      %p55 = scmp.eq.s32.totalorder %s23, 0
      %p56 = por %p54, %p55
      %p57 = scmp.ne.s32.totalorder %s43, %s44
      %p58 = scmp.eq.s32.totalorder %s24, 3
      %p59 = por %p57, %p58
      %p61 = scmp.ne.s32.totalorder %s44, %s60
      %p62 = scmp.eq.s32.totalorder %s24, 0
      %p63 = por %p61, %p62
      %s64 = ssub.s32 %s26, %s33
      %p65 = scmp.eq.s32.totalorder %s64, 0
      %s67 = sadd.s32 %s66, 1
      %s68 = scalar_select %p65, %s66, %s67
      %p71 = pneg %p65
      %p72 = scmp.eq.s32.totalorder %s18, 3
      %p73 = por %p71, %p72
      %p74 = scmp.ne.s32.totalorder %s66, %s69
      %p75 = scmp.eq.s32.totalorder %s18, 0
      %p76 = por %p74, %p75
      %p77 = scmp.ne.s32.totalorder %s66, %s69
      %p78 = scmp.eq.s32.totalorder %s23, 3
      %p79 = por %p77, %p78
      %p80 = scmp.ne.s32.totalorder %s69, %s70
      %p81 = scmp.eq.s32.totalorder %s23, 0
      %p82 = por %p80, %p81
      %p83 = scmp.ne.s32.totalorder %s69, %s70
      %p84 = scmp.eq.s32.totalorder %s24, 3
      %p85 = por %p83, %p84
      %p87 = scmp.ne.s32.totalorder %s70, %s86
      %p88 = scmp.eq.s32.totalorder %s24, 0
      %p89 = por %p87, %p88
      %s90 = ssub.s32 %s26, %s33
      %p91 = scmp.eq.s32.totalorder %s90, 0
      %s93 = sadd.s32 %s92, 1
      %s94 = scalar_select %p91, %s92, %s93
      %p97 = pneg %p91
      %p98 = scmp.eq.s32.totalorder %s18, 3
      %p99 = por %p97, %p98
      %p100 = scmp.ne.s32.totalorder %s92, %s95
      %p101 = scmp.eq.s32.totalorder %s18, 0
      %p102 = por %p100, %p101
      %p103 = scmp.ne.s32.totalorder %s92, %s95
      %p104 = scmp.eq.s32.totalorder %s23, 3
      %p105 = por %p103, %p104
      %p106 = scmp.ne.s32.totalorder %s95, %s96
      %p107 = scmp.eq.s32.totalorder %s23, 0
      %p108 = por %p106, %p107
      %p109 = scmp.ne.s32.totalorder %s95, %s96
      %p110 = scmp.eq.s32.totalorder %s24, 3
      %p111 = por %p109, %p110
      %p113 = scmp.ne.s32.totalorder %s96, %s112
      %p114 = scmp.eq.s32.totalorder %s24, 0
      %p115 = por %p113, %p114
      %s116 = ssub.s32 %s25, %s37
      %p117 = scmp.eq.s32.totalorder %s116, 0
      %s119 = sadd.s32 %s118, 1
      %s120 = scalar_select %p117, %s118, %s119
      %p123 = pneg %p117
      %p124 = scmp.eq.s32.totalorder %s18, 3
      %p125 = por %p123, %p124
      %p126 = scmp.ne.s32.totalorder %s118, %s121
      %p127 = scmp.eq.s32.totalorder %s18, 0
      %p128 = por %p126, %p127
      %p129 = scmp.ne.s32.totalorder %s118, %s121
      %p130 = scmp.eq.s32.totalorder %s23, 3
      %p131 = por %p129, %p130
      %p132 = scmp.ne.s32.totalorder %s121, %s122
      %p133 = scmp.eq.s32.totalorder %s23, 0
      %p134 = por %p132, %p133
      %p135 = scmp.ne.s32.totalorder %s121, %s122
      %p136 = scmp.eq.s32.totalorder %s24, 3
      %p137 = por %p135, %p136
      %p139 = scmp.ne.s32.totalorder %s122, %s138
      %p140 = scmp.eq.s32.totalorder %s24, 0
      %p141 = por %p139, %p140
      %p142 = scmp.le.s32.totalorder 1, %s18
      %p143 = scmp.lt.s32.totalorder %s18, 5
      %p144 = pnand %p142, %p143
      %p145 = pneg %p144
      // Predicated region
      $region9: #{tpu_custom_call.1} parent=5 // pred_check
        _
      $region10: #{tpu_custom_call.1} parent=5 // pred_check_branch
        %147 = sbr.rel (%p144) target = $region12
      $region11: #{tpu_custom_call.1} parent=5 // pred_region
        %s148 = ssub.s32 %s18, 1
      $region12: #{tpu_custom_call.1} parent=5 // pred_fallthru
        _
      %p149 = scmp.lt.s32.totalorder %s18, 4
      // Predicated region
      $region13: #{tpu_custom_call.1} parent=5 // pred_check
        %p150 = pneg %p149
      $region14: #{tpu_custom_call.1} parent=5 // pred_check_branch
        %152 = sbr.rel (%p150) target = $region16
      $region15: #{tpu_custom_call.1} parent=5 // pred_region
        // Predicated region
        $region17: #{tpu_custom_call.1} parent=15 // pred_check
          %p153 = pneg %p50
        $region18: #{tpu_custom_call.1} parent=15 // pred_check_branch
          %155 = sbr.rel (%p153) target = $region20
        $region19: #{tpu_custom_call.1} parent=15 // pred_region
          %s156 = sand.u32 %s40, 1
          %s157 = scalar_lea.sflag [#allocation4], %s156
          %s158 = sand.u32 %s40, 1
          %s159 = smul.addr %s158, 64
          %s160 = scalar_lea.vmem [#allocation3], %s159
          %s161 = smul.u32 8, %s25
          %163 = vsyncadd %s157, 0
          %s164 = smul.addr %s161, 8
          %s165 = scalar_lea.hbm %s0, %s164
          %s166 = sshll.u32 %s165, 4
          %s167 = int_to_ptr.hbm [resolvable:$true] %s166
          %s168 = sshll.u32 %s160, 4
          %s169 = int_to_ptr.vmem [resolvable:$true] %s168
          %174 = dma.hbm_to_vmem [thread:$0]  %s167, 1024, %s169, %s157, 128, 128, 8
        $region20: #{tpu_custom_call.1} parent=15 // pred_fallthru
          _
        // Predicated region
        $region21: #{tpu_custom_call.1} parent=15 // pred_check
          %p175 = pneg %p76
        $region22: #{tpu_custom_call.1} parent=15 // pred_check_branch
          %177 = sbr.rel (%p175) target = $region24
        $region23: #{tpu_custom_call.1} parent=15 // pred_region
          %s178 = sand.u32 %s18, 1
          %s179 = scalar_lea.sflag [#allocation7], %s178
          %s180 = sand.u32 %s66, 1
          %s181 = smul.addr %s180, 128
          %s182 = scalar_lea.vmem [#allocation6], %s181
          %s183 = smul.u32 2, %s26
          %185 = vsyncadd %s179, 0
          %s186 = smul.addr %s183, 4
          %s187 = scalar_lea.hbm %s1, %s186
          %s188 = sshll.u32 %s187, 4
          %s189 = int_to_ptr.hbm [resolvable:$true] %s188
          %s190 = sshll.u32 %s182, 4
          %s191 = int_to_ptr.vmem [resolvable:$true] %s190
          %196 = dma.hbm_to_vmem [thread:$0]  %s189, 2048, %s191, %s179, 256, 128, 8
        $region24: #{tpu_custom_call.1} parent=15 // pred_fallthru
          _
        // Predicated region
        $region25: #{tpu_custom_call.1} parent=15 // pred_check
          %p197 = pneg %p102
        $region26: #{tpu_custom_call.1} parent=15 // pred_check_branch
          %199 = sbr.rel (%p197) target = $region28
        $region27: #{tpu_custom_call.1} parent=15 // pred_region
          %s200 = sand.u32 %s18, 1
          %s201 = scalar_lea.sflag [#allocation7], %s200
          %s202 = sand.u32 %s92, 1
          %s203 = smul.addr %s202, 64
          %s204 = scalar_lea.vmem [#allocation8], %s203
          %s205 = smul.u32 16, %s26
          %207 = vsyncadd %s201, 0
          %s208 = smul.addr %s205, 4
          %s209 = scalar_lea.hbm %s2, %s208
          %s210 = sshll.u32 %s209, 4
          %s211 = int_to_ptr.hbm [resolvable:$true] %s210
          %s212 = sshll.u32 %s204, 4
          %s213 = int_to_ptr.vmem [resolvable:$true] %s212
          %218 = dma.hbm_to_vmem [thread:$0]  %s211, 1024, %s213, %s201, 64, 64, 4
        $region28: #{tpu_custom_call.1} parent=15 // pred_fallthru
          _
      $region16: #{tpu_custom_call.1} parent=5 // pred_fallthru
        _
      %p219 = scmp.le.s32.totalorder 1, %s18
      %p220 = scmp.lt.s32.totalorder %s18, 5
      %p221 = pnand %p219, %p220
      %p222 = pneg %p221
      // Predicated region
      $region29: #{tpu_custom_call.1} parent=5 // pred_check
        _
      $region30: #{tpu_custom_call.1} parent=5 // pred_check_branch
        %224 = sbr.rel (%p221) target = $region32
      $region31: #{tpu_custom_call.1} parent=5 // pred_region
        %s225 = ssub.s32 %s18, 1
        %s226 = sand.u32 %s43, 1
        %s227 = scalar_lea.sflag [#allocation4], %s226
        %s228 = sand.u32 %s43, 1
        %s229 = smul.addr %s228, 64
        %s230 = scalar_lea.vmem [#allocation3], %s229
        // Predicated region
        $region33: #{tpu_custom_call.1} parent=31 // pred_check
          %p231 = pneg %p56
        $region34: #{tpu_custom_call.1} parent=31 // pred_check_branch
          %233 = sbr.rel (%p231) target = $region36
        $region35: #{tpu_custom_call.1} parent=31 // pred_region
          %235 = dma.done %s227, 1024
        $region36: #{tpu_custom_call.1} parent=31 // pred_fallthru
          _
        %s236 = sand.u32 %s23, 1
        %s237 = scalar_lea.sflag [#allocation7], %s236
        %s238 = sand.u32 %s69, 1
        %s239 = smul.addr %s238, 128
        %s240 = scalar_lea.vmem [#allocation6], %s239
        // Predicated region
        $region37: #{tpu_custom_call.1} parent=31 // pred_check
          %p241 = pneg %p82
        $region38: #{tpu_custom_call.1} parent=31 // pred_check_branch
          %243 = sbr.rel (%p241) target = $region40
        $region39: #{tpu_custom_call.1} parent=31 // pred_region
          %245 = dma.done %s237, 2048
        $region40: #{tpu_custom_call.1} parent=31 // pred_fallthru
          _
        %s246 = sand.u32 %s23, 1
        %s247 = scalar_lea.sflag [#allocation7], %s246
        %s248 = sand.u32 %s95, 1
        %s249 = smul.addr %s248, 64
        %s250 = scalar_lea.vmem [#allocation8], %s249
        // Predicated region
        $region41: #{tpu_custom_call.1} parent=31 // pred_check
          %p251 = pneg %p108
        $region42: #{tpu_custom_call.1} parent=31 // pred_check_branch
          %253 = sbr.rel (%p251) target = $region44
        $region43: #{tpu_custom_call.1} parent=31 // pred_region
          %255 = dma.done %s247, 1024
        $region44: #{tpu_custom_call.1} parent=31 // pred_fallthru
          _
        %s256 = sand.u32 %s43, 1
        %s257 = scalar_lea.sflag [#allocation4], %s256
        %s258 = sand.u32 %s43, 1
        %s259 = smul.addr %s258, 64
        %s260 = scalar_lea.vmem [#allocation3], %s259
        %p261 = pneg %p56
        %p262 = pneg %p53
        %s263 = sand.u32 %s23, 1
        %s264 = scalar_lea.sflag [#allocation7], %s263
        %s265 = sand.u32 %s69, 1
        %s266 = smul.addr %s265, 128
        %s267 = scalar_lea.vmem [#allocation6], %s266
        %p268 = pneg %p82
        %p269 = pneg %p79
        %s270 = sand.u32 %s23, 1
        %s271 = scalar_lea.sflag [#allocation7], %s270
        %s272 = sand.u32 %s95, 1
        %s273 = smul.addr %s272, 64
        %s274 = scalar_lea.vmem [#allocation8], %s273
        %p275 = pneg %p108
        %p276 = pneg %p105
        %p277 = pneg %p134
        %p278 = pneg %p131
        %s279 = sand.u32 %s121, 1
        %s280 = scalar_lea.sflag [#allocation5], %s279
        %s281 = sand.u32 %s121, 1
        %s282 = smul.addr %s281, 64
        %s283 = scalar_lea.vmem [#allocation9], %s282
        %s284 = smul.u32 8, %s27
        %s285 = smul.u32 2, %s28
        %s286 = smul.u32 16, %s28
        %s287 = smul.u32 8, %s27
        %p288 = scmp.eq.s32.totalorder %s28, 0
        // Predicated region
        $region45: #{tpu_custom_call.1} parent=31 // pred_check
          %p289 = pneg %p288
        $region46: #{tpu_custom_call.1} parent=31 // pred_check_branch
          %291 = sbr.rel (%p289) target = $region48
        $region47: #{tpu_custom_call.1} parent=31 // pred_region
          %292 = vst [vmem:[#allocation2] sm:$0xff] 0.0
          %293 = vst [vmem:[#allocation2 + $0x8] sm:$0xff] 0.0
          %294 = vst [vmem:[#allocation2 + $0x10] sm:$0xff] 0.0
          %295 = vst [vmem:[#allocation2 + $0x18] sm:$0xff] 0.0
          %296 = vst [vmem:[#allocation2 + $0x20] sm:$0xff] 0.0
          %297 = vst [vmem:[#allocation2 + $0x28] sm:$0xff] 0.0
          %298 = vst [vmem:[#allocation2 + $0x30] sm:$0xff] 0.0
          %299 = vst [vmem:[#allocation2 + $0x38] sm:$0xff] 0.0
        $region48: #{tpu_custom_call.1} parent=31 // pred_fallthru
          _
        %v300 = vld [vmem:[%s230] sm:$0xff]
        %v301 = vld [vmem:[%s230 + $0x8] sm:$0xff]
        %v302 = vld [vmem:[%s230 + $0x10] sm:$0xff]
        %v303 = vld [vmem:[%s230 + $0x18] sm:$0xff]
        %v304 = vld [vmem:[%s230 + $0x20] sm:$0xff]
        %v305 = vld [vmem:[%s230 + $0x28] sm:$0xff]
        %v306 = vld [vmem:[%s230 + $0x30] sm:$0xff]
        %v307 = vld [vmem:[%s230 + $0x38] sm:$0xff]
        %v308 = vpack.c.bf16 %v301, %v300
        %v309 = vpack.c.bf16 %v303, %v302
        %v310 = vpack.c.bf16 %v305, %v304
        %v311 = vpack.c.bf16 %v307, %v306
        %v312 = vld [vmem:[%s240] sm:$0xff]
        %v313 = vld [vmem:[%s240 + $0x8] sm:$0xff]
        %v314 = vld [vmem:[%s240 + $0x10] sm:$0xff]
        %v315 = vld [vmem:[%s240 + $0x18] sm:$0xff]
        %v316 = vld [vmem:[%s240 + $0x20] sm:$0xff]
        %v317 = vld [vmem:[%s240 + $0x28] sm:$0xff]
        %v318 = vld [vmem:[%s240 + $0x30] sm:$0xff]
        %v319 = vld [vmem:[%s240 + $0x38] sm:$0xff]
        %v320 = vld [vmem:[%s240 + $0x40] sm:$0xff]
        %v321 = vld [vmem:[%s240 + $0x48] sm:$0xff]
        %v322 = vld [vmem:[%s240 + $0x50] sm:$0xff]
        %v323 = vld [vmem:[%s240 + $0x58] sm:$0xff]
        %v324 = vld [vmem:[%s240 + $0x60] sm:$0xff]
        %v325 = vld [vmem:[%s240 + $0x68] sm:$0xff]
        %v326 = vld [vmem:[%s240 + $0x70] sm:$0xff]
        %v327 = vld [vmem:[%s240 + $0x78] sm:$0xff]
        %v344 = vunpack.c.l.b16 %v312
        %v345 = vunpack.c.h.b16 %v312
        %v346 = vunpack.c.l.b16 %v313
        %v347 = vunpack.c.h.b16 %v313
        %v348 = vunpack.c.l.b16 %v314
        %v349 = vunpack.c.h.b16 %v314
        %v350 = vunpack.c.l.b16 %v315
        %v351 = vunpack.c.h.b16 %v315
        %v352 = vunpack.c.l.b16 %v316
        %v353 = vunpack.c.h.b16 %v316
        %v354 = vunpack.c.l.b16 %v317
        %v355 = vunpack.c.h.b16 %v317
        %v356 = vunpack.c.l.b16 %v318
        %v357 = vunpack.c.h.b16 %v318
        %v358 = vunpack.c.l.b16 %v319
        %v359 = vunpack.c.h.b16 %v319
        %v360 = vunpack.c.l.b16 %v320
        %v361 = vunpack.c.h.b16 %v320
        %v362 = vunpack.c.l.b16 %v321
        %v363 = vunpack.c.h.b16 %v321
        %v364 = vunpack.c.l.b16 %v322
        %v365 = vunpack.c.h.b16 %v322
        %v366 = vunpack.c.l.b16 %v323
        %v367 = vunpack.c.h.b16 %v323
        %v368 = vunpack.c.l.b16 %v324
        %v369 = vunpack.c.h.b16 %v324
        %v370 = vunpack.c.l.b16 %v325
        %v371 = vunpack.c.h.b16 %v325
        %v372 = vunpack.c.l.b16 %v326
        %v373 = vunpack.c.h.b16 %v326
        %v374 = vunpack.c.l.b16 %v327
        %v375 = vunpack.c.h.b16 %v327
        %v376 = vpack.c.b16 %v346, %v344
        %v377 = vpack.c.b16 %v347, %v345
        %v378 = vpack.c.b16 %v350, %v348
        %v379 = vpack.c.b16 %v351, %v349
        %v380 = vpack.c.b16 %v354, %v352
        %v381 = vpack.c.b16 %v355, %v353
        %v382 = vpack.c.b16 %v358, %v356
        %v383 = vpack.c.b16 %v359, %v357
        %v384 = vpack.c.b16 %v362, %v360
        %v385 = vpack.c.b16 %v363, %v361
        %v386 = vpack.c.b16 %v366, %v364
        %v387 = vpack.c.b16 %v367, %v365
        %v388 = vpack.c.b16 %v370, %v368
        %v389 = vpack.c.b16 %v371, %v369
        %v390 = vpack.c.b16 %v374, %v372
        %v391 = vpack.c.b16 %v375, %v373
        %408 = vmatpush.bf16.msra.mxu0 %v390
        %409 = vmatpush.bf16.msra.mxu0 %v388
        %410 = vmatpush.bf16.msra.mxu0 %v386
        %411 = vmatpush.bf16.msra.mxu0 %v384
        %412 = vmatpush.bf16.msra.mxu0 %v382
        %413 = vmatpush.bf16.msra.mxu0 %v380
        %414 = vmatpush.bf16.msra.mxu0 %v378
        %415 = vmatpush.bf16.msra.mxu0 %v376
        %416 = vmatmul.bf16.gmra.mxu0 %v308
        %v417 = vpop.f32.mrf.mxu0
        %v418 = vadd.f32 0.0, %v417
        %v419 = vpop.f32.mrf.mxu0
        %v420 = vadd.f32 0.0, %v419
        %421 = vmatmul.bf16.gmra.mxu0 %v309
        %v422 = vpop.f32.mrf.mxu0
        %v423 = vadd.f32 0.0, %v422
        %v424 = vpop.f32.mrf.mxu0
        %v425 = vadd.f32 0.0, %v424
        %426 = vmatmul.bf16.gmra.mxu0 %v310
        %v427 = vpop.f32.mrf.mxu0
        %v428 = vadd.f32 0.0, %v427
        %v429 = vpop.f32.mrf.mxu0
        %v430 = vadd.f32 0.0, %v429
        %431 = vmatmul.bf16.gmra.mxu0 %v311
        %v432 = vpop.f32.mrf.mxu0
        %v433 = vadd.f32 0.0, %v432
        %v434 = vpop.f32.mrf.mxu0
        %v435 = vadd.f32 0.0, %v434
        %436 = vdwg.mxu0
        %437 = vmatpush.bf16.msra.mxu0 %v391
        %438 = vmatpush.bf16.msra.mxu0 %v389
        %439 = vmatpush.bf16.msra.mxu0 %v387
        %440 = vmatpush.bf16.msra.mxu0 %v385
        %441 = vmatpush.bf16.msra.mxu0 %v383
        %442 = vmatpush.bf16.msra.mxu0 %v381
        %443 = vmatpush.bf16.msra.mxu0 %v379
        %444 = vmatpush.bf16.msra.mxu0 %v377
        %445 = vmatmul.bf16.gmra.mxu0 %v308
        %v446 = vpop.f32.mrf.mxu0
        %v447 = vadd.f32 0.0, %v446
        %v448 = vpop.f32.mrf.mxu0
        %v449 = vadd.f32 0.0, %v448
        %450 = vmatmul.bf16.gmra.mxu0 %v309
        %v451 = vpop.f32.mrf.mxu0
        %v452 = vadd.f32 0.0, %v451
        %v453 = vpop.f32.mrf.mxu0
        %v454 = vadd.f32 0.0, %v453
        %455 = vmatmul.bf16.gmra.mxu0 %v310
        %v456 = vpop.f32.mrf.mxu0
        %v457 = vadd.f32 0.0, %v456
        %v458 = vpop.f32.mrf.mxu0
        %v459 = vadd.f32 0.0, %v458
        %460 = vmatmul.bf16.gmra.mxu0 %v311
        %v461 = vpop.f32.mrf.mxu0
        %v462 = vadd.f32 0.0, %v461
        %v463 = vpop.f32.mrf.mxu0
        %v464 = vadd.f32 0.0, %v463
        %465 = vdwg.mxu0
        %v466 = vmul.f32 %v447, 0.5
        %v467 = vmul.f32 %v449, 0.5
        %v468 = vmul.f32 %v452, 0.5
        %v469 = vmul.f32 %v454, 0.5
        %v470 = vmul.f32 %v457, 0.5
        %v471 = vmul.f32 %v459, 0.5
        %v472 = vmul.f32 %v462, 0.5
        %v473 = vmul.f32 %v464, 0.5
        %v474 = vmul.f32 %v447, 0.044715
        %v475 = vmul.f32 %v449, 0.044715
        %v476 = vmul.f32 %v452, 0.044715
        %v477 = vmul.f32 %v454, 0.044715
        %v478 = vmul.f32 %v457, 0.044715
        %v479 = vmul.f32 %v459, 0.044715
        %v480 = vmul.f32 %v462, 0.044715
        %v481 = vmul.f32 %v464, 0.044715
        %v482 = vmul.f32 %v474, %v447
        %v483 = vmul.f32 %v475, %v449
        %v484 = vmul.f32 %v476, %v452
        %v485 = vmul.f32 %v477, %v454
        %v486 = vmul.f32 %v478, %v457
        %v487 = vmul.f32 %v479, %v459
        %v488 = vmul.f32 %v480, %v462
        %v489 = vmul.f32 %v481, %v464
        %v490 = vmul.f32 %v482, %v447
        %v491 = vmul.f32 %v483, %v449
        %v492 = vmul.f32 %v484, %v452
        %v493 = vmul.f32 %v485, %v454
        %v494 = vmul.f32 %v486, %v457
        %v495 = vmul.f32 %v487, %v459
        %v496 = vmul.f32 %v488, %v462
        %v497 = vmul.f32 %v489, %v464
        %v498 = vadd.f32 %v447, %v490
        %v499 = vadd.f32 %v449, %v491
        %v500 = vadd.f32 %v452, %v492
        %v501 = vadd.f32 %v454, %v493
        %v502 = vadd.f32 %v457, %v494
        %v503 = vadd.f32 %v459, %v495
        %v504 = vadd.f32 %v462, %v496
        %v505 = vadd.f32 %v464, %v497
        %v506 = vmul.f32 %v498, 0.7978846
        %v507 = vmul.f32 %v499, 0.7978846
        %v508 = vmul.f32 %v500, 0.7978846
        %v509 = vmul.f32 %v501, 0.7978846
        %v510 = vmul.f32 %v502, 0.7978846
        %v511 = vmul.f32 %v503, 0.7978846
        %v512 = vmul.f32 %v504, 0.7978846
        %v513 = vmul.f32 %v505, 0.7978846
        %v514 = vtanh.pop %v506
        %v515 = vtanh.pop %v507
        %v516 = vtanh.pop %v508
        %v517 = vtanh.pop %v509
        %v518 = vtanh.pop %v510
        %v519 = vtanh.pop %v511
        %v520 = vtanh.pop %v512
        %v521 = vtanh.pop %v513
        %v522 = vadd.f32 %v514, 1.0
        %v523 = vadd.f32 %v515, 1.0
        %v524 = vadd.f32 %v516, 1.0
        %v525 = vadd.f32 %v517, 1.0
        %v526 = vadd.f32 %v518, 1.0
        %v527 = vadd.f32 %v519, 1.0
        %v528 = vadd.f32 %v520, 1.0
        %v529 = vadd.f32 %v521, 1.0
        %v530 = vmul.f32 %v466, %v522
        %v531 = vmul.f32 %v467, %v523
        %v532 = vmul.f32 %v468, %v524
        %v533 = vmul.f32 %v469, %v525
        %v534 = vmul.f32 %v470, %v526
        %v535 = vmul.f32 %v471, %v527
        %v536 = vmul.f32 %v472, %v528
        %v537 = vmul.f32 %v473, %v529
        %v538 = vmul.f32 %v418, %v530
        %v539 = vmul.f32 %v420, %v531
        %v540 = vmul.f32 %v423, %v532
        %v541 = vmul.f32 %v425, %v533
        %v542 = vmul.f32 %v428, %v534
        %v543 = vmul.f32 %v430, %v535
        %v544 = vmul.f32 %v433, %v536
        %v545 = vmul.f32 %v435, %v537
        %v546 = vld [vmem:[#allocation2] sm:$0xff]
        %v547 = vld [vmem:[#allocation2 + $0x8] sm:$0xff]
        %v548 = vld [vmem:[#allocation2 + $0x10] sm:$0xff]
        %v549 = vld [vmem:[#allocation2 + $0x18] sm:$0xff]
        %v550 = vld [vmem:[#allocation2 + $0x20] sm:$0xff]
        %v551 = vld [vmem:[#allocation2 + $0x28] sm:$0xff]
        %v552 = vld [vmem:[#allocation2 + $0x30] sm:$0xff]
        %v553 = vld [vmem:[#allocation2 + $0x38] sm:$0xff]
        %v554 = vpack.c.bf16 %v539, %v538
        %v555 = vpack.c.bf16 %v541, %v540
        %v556 = vpack.c.bf16 %v543, %v542
        %v557 = vpack.c.bf16 %v545, %v544
        %v558 = vld [vmem:[%s250] sm:$0xf]
        %v559 = vld [vmem:[%s250 + $0x4] sm:$0xf]
        %v560 = vld [vmem:[%s250 + $0x8] sm:$0xf]
        %v561 = vld [vmem:[%s250 + $0xc] sm:$0xf]
        %v562 = vld [vmem:[%s250 + $0x10] sm:$0xf]
        %v563 = vld [vmem:[%s250 + $0x14] sm:$0xf]
        %v564 = vld [vmem:[%s250 + $0x18] sm:$0xf]
        %v565 = vld [vmem:[%s250 + $0x1c] sm:$0xf]
        %v566 = vld [vmem:[%s250 + $0x20] sm:$0xf]
        %v567 = vld [vmem:[%s250 + $0x24] sm:$0xf]
        %v568 = vld [vmem:[%s250 + $0x28] sm:$0xf]
        %v569 = vld [vmem:[%s250 + $0x2c] sm:$0xf]
        %v570 = vld [vmem:[%s250 + $0x30] sm:$0xf]
        %v571 = vld [vmem:[%s250 + $0x34] sm:$0xf]
        %v572 = vld [vmem:[%s250 + $0x38] sm:$0xf]
        %v573 = vld [vmem:[%s250 + $0x3c] sm:$0xf]
        %v590 = vunpack.c.l.b16 %v558
        %v591 = vunpack.c.l.b16 %v559
        %v592 = vunpack.c.l.b16 %v560
        %v593 = vunpack.c.l.b16 %v561
        %v594 = vunpack.c.l.b16 %v562
        %v595 = vunpack.c.l.b16 %v563
        %v596 = vunpack.c.l.b16 %v564
        %v597 = vunpack.c.l.b16 %v565
        %v598 = vunpack.c.l.b16 %v566
        %v599 = vunpack.c.l.b16 %v567
        %v600 = vunpack.c.l.b16 %v568
        %v601 = vunpack.c.l.b16 %v569
        %v602 = vunpack.c.l.b16 %v570
        %v603 = vunpack.c.l.b16 %v571
        %v604 = vunpack.c.l.b16 %v572
        %v605 = vunpack.c.l.b16 %v573
        %v606 = vpack.c.b16 %v591, %v590
        %v607 = vpack.c.b16 %v593, %v592
        %v608 = vpack.c.b16 %v595, %v594
        %v609 = vpack.c.b16 %v597, %v596
        %v610 = vpack.c.b16 %v599, %v598
        %v611 = vpack.c.b16 %v601, %v600
        %v612 = vpack.c.b16 %v603, %v602
        %v613 = vpack.c.b16 %v605, %v604
        %622 = vmatpush.bf16.msra.mxu0 %v613
        %623 = vmatpush.bf16.msra.mxu0 %v612
        %624 = vmatpush.bf16.msra.mxu0 %v611
        %625 = vmatpush.bf16.msra.mxu0 %v610
        %626 = vmatpush.bf16.msra.mxu0 %v609
        %627 = vmatpush.bf16.msra.mxu0 %v608
        %628 = vmatpush.bf16.msra.mxu0 %v607
        %629 = vmatpush.bf16.msra.mxu0 %v606
        %630 = vmatmul.bf16.gmra.mxu0 %v554
        %v631 = vpop.f32.mrf.mxu0
        %v632 = vadd.f32 0.0, %v631
        %v633 = vpop.f32.mrf.mxu0
        %v634 = vadd.f32 0.0, %v633
        %635 = vmatmul.bf16.gmra.mxu0 %v555
        %v636 = vpop.f32.mrf.mxu0
        %v637 = vadd.f32 0.0, %v636
        %v638 = vpop.f32.mrf.mxu0
        %v639 = vadd.f32 0.0, %v638
        %640 = vmatmul.bf16.gmra.mxu0 %v556
        %v641 = vpop.f32.mrf.mxu0
        %v642 = vadd.f32 0.0, %v641
        %v643 = vpop.f32.mrf.mxu0
        %v644 = vadd.f32 0.0, %v643
        %645 = vmatmul.bf16.gmra.mxu0 %v557
        %v646 = vpop.f32.mrf.mxu0
        %v647 = vadd.f32 0.0, %v646
        %v648 = vpop.f32.mrf.mxu0
        %v649 = vadd.f32 0.0, %v648
        %650 = vdwg.mxu0
        %v651 = vadd.f32 %v546, %v632
        %v652 = vadd.f32 %v547, %v634
        %v653 = vadd.f32 %v548, %v637
        %v654 = vadd.f32 %v549, %v639
        %v655 = vadd.f32 %v550, %v642
        %v656 = vadd.f32 %v551, %v644
        %v657 = vadd.f32 %v552, %v647
        %v658 = vadd.f32 %v553, %v649
        %659 = vst [vmem:[#allocation2] sm:$0xff] %v651
        %660 = vst [vmem:[#allocation2 + $0x8] sm:$0xff] %v652
        %661 = vst [vmem:[#allocation2 + $0x10] sm:$0xff] %v653
        %662 = vst [vmem:[#allocation2 + $0x18] sm:$0xff] %v654
        %663 = vst [vmem:[#allocation2 + $0x20] sm:$0xff] %v655
        %664 = vst [vmem:[#allocation2 + $0x28] sm:$0xff] %v656
        %665 = vst [vmem:[#allocation2 + $0x30] sm:$0xff] %v657
        %666 = vst [vmem:[#allocation2 + $0x38] sm:$0xff] %v658
        %p667 = scmp.eq.s32.totalorder %s28, 1
        // Predicated region
        $region49: #{tpu_custom_call.1} parent=31 // pred_check
          %p668 = pneg %p667
        $region50: #{tpu_custom_call.1} parent=31 // pred_check_branch
          %670 = sbr.rel (%p668) target = $region52
        $region51: #{tpu_custom_call.1} parent=31 // pred_region
          %v671 = vld [vmem:[#allocation2] sm:$0xff]
          %v672 = vld [vmem:[#allocation2 + $0x8] sm:$0xff]
          %v673 = vld [vmem:[#allocation2 + $0x10] sm:$0xff]
          %v674 = vld [vmem:[#allocation2 + $0x18] sm:$0xff]
          %v675 = vld [vmem:[#allocation2 + $0x20] sm:$0xff]
          %v676 = vld [vmem:[#allocation2 + $0x28] sm:$0xff]
          %v677 = vld [vmem:[#allocation2 + $0x30] sm:$0xff]
          %v678 = vld [vmem:[#allocation2 + $0x38] sm:$0xff]
          %679 = vst [vmem:[%s283] sm:$0xff] %v671
          %680 = vst [vmem:[%s283 + $0x8] sm:$0xff] %v672
          %681 = vst [vmem:[%s283 + $0x10] sm:$0xff] %v673
          %682 = vst [vmem:[%s283 + $0x18] sm:$0xff] %v674
          %683 = vst [vmem:[%s283 + $0x20] sm:$0xff] %v675
          %684 = vst [vmem:[%s283 + $0x28] sm:$0xff] %v676
          %685 = vst [vmem:[%s283 + $0x30] sm:$0xff] %v677
          %686 = vst [vmem:[%s283 + $0x38] sm:$0xff] %v678
        $region52: #{tpu_custom_call.1} parent=31 // pred_fallthru
          _
        %s687 = sand.u32 %s121, 1
        %s688 = scalar_lea.sflag [#allocation5], %s687
        %s689 = sand.u32 %s121, 1
        %s690 = smul.addr %s689, 64
        %s691 = scalar_lea.vmem [#allocation9], %s690
        // Predicated region
        $region53: #{tpu_custom_call.1} parent=31 // pred_check
          %p692 = pneg %p131
        $region54: #{tpu_custom_call.1} parent=31 // pred_check_branch
          %694 = sbr.rel (%p692) target = $region56
        $region55: #{tpu_custom_call.1} parent=31 // pred_region
          %s695 = smul.u32 8, %s27
          %697 = vsyncadd %s688, 0
          %s698 = smul.addr %s695, 8
          %s699 = scalar_lea.hbm %s3, %s698
          %s700 = sshll.u32 %s691, 4
          %s701 = int_to_ptr.vmem [resolvable:$true] %s700
          %s702 = sshll.u32 %s699, 4
          %s703 = int_to_ptr.hbm [resolvable:$true] %s702
          %708 = dma.vmem_to_hbm [thread:$0]  %s701, 1024, %s703, %s688, 128, 128, 8
        $region56: #{tpu_custom_call.1} parent=31 // pred_fallthru
          _
      $region32: #{tpu_custom_call.1} parent=5 // pred_fallthru
        _
      %p709 = scmp.le.s32.totalorder 2, %s18
      // Predicated region
      $region57: #{tpu_custom_call.1} parent=5 // pred_check
        %p710 = pneg %p709
      $region58: #{tpu_custom_call.1} parent=5 // pred_check_branch
        %712 = sbr.rel (%p710) target = $region60
      $region59: #{tpu_custom_call.1} parent=5 // pred_region
        %s713 = ssub.s32 %s18, 2
        // Predicated region
        $region61: #{tpu_custom_call.1} parent=59 // pred_check
          %p714 = pneg %p137
        $region62: #{tpu_custom_call.1} parent=59 // pred_check_branch
          %716 = sbr.rel (%p714) target = $region64
        $region63: #{tpu_custom_call.1} parent=59 // pred_region
          %s717 = sand.u32 %s122, 1
          %s718 = scalar_lea.sflag [#allocation5], %s717
          %s719 = sand.u32 %s122, 1
          %s720 = smul.addr %s719, 64
          %s721 = scalar_lea.vmem [#allocation9], %s720
          %723 = dma.done %s718, 1024
        $region64: #{tpu_custom_call.1} parent=59 // pred_fallthru
          _
      $region60: #{tpu_custom_call.1} parent=5 // pred_fallthru
        _
    $region6: #{tpu_custom_call.1} parent=1 // loop_footer
      %s22 = sadd.s32 1, %s18
    $region7: #{tpu_custom_call.1} parent=1 // loop_footer_branch
      %17 = sbr.rel target = $region3
    $region8: #{tpu_custom_call.1} parent=1 // loop_exit
      _
    %724 = vsyncpa [#allocation4], 1
    %s725 = scalar_lea.sflag [#allocation4], 1
    %726 = vsyncpa %s725, 1
    %727 = vsyncpa [#allocation7], 1
    %s728 = scalar_lea.sflag [#allocation7], 1
    %729 = vsyncpa %s728, 1
    %730 = vsyncpa [#allocation5], 1
    %s731 = scalar_lea.sflag [#allocation5], 1
    %732 = vsyncpa %s731, 1

</llo_original>
